<compile_context>
chip_gen: v7x
topology: tpu7x:2x2x1
jax: 0.10.0
libtpu: 0.0.40
codegen_flags: <defaults>
</compile_context>

<pallas_src>
import functools

import jax
import jax.numpy as jnp
from jax import lax
from jax.experimental import pallas as pl
from jax.experimental.pallas import tpu as pltpu

_LANE = 128
_SUBLANE = 8
_IGNORE_INDEX = -100  # nn.CrossEntropyLoss default


def _round_up(x, m):
    return ((x + m - 1) // m) * m


def _nll_and_logits(rep, wt, bias_f32, labels, num_labels):
    # rep: (TB, D) float; wt: (D, Lp) same dtype; bias_f32: (1, Lp) f32;
    # labels: (TB, 1) int32.
    logits = jnp.dot(rep, wt, preferred_element_type=jnp.float32) + bias_f32   # (TB, Lp) f32
    col_ids = lax.broadcasted_iota(jnp.int32, logits.shape, 1)                 # (TB, Lp)
    col_valid = col_ids < num_labels
    # Mask the lane-padding columns out of the logsumexp.
    masked = jnp.where(col_valid, logits, -jnp.inf)
    m = jnp.max(masked, axis=-1, keepdims=True)                                # (TB, 1)
    lse = m + jnp.log(jnp.sum(jnp.exp(masked - m), axis=-1, keepdims=True))    # (TB, 1)
    onehot = (col_ids == labels).astype(jnp.float32)                           # (TB, Lp)
    label_logit = jnp.sum(logits * onehot, axis=-1, keepdims=True)             # (TB, 1)
    # ignore_index / out-of-range labels contribute 0 (excluded from the mean).
    row_valid = jnp.logical_and(labels >= 0, labels < num_labels)              # (TB, 1)
    nll = jnp.where(row_valid, lse - label_logit, 0.0)                         # (TB, 1)
    return nll, logits


def _loss_kernel(rep_ref, wt_ref, b_ref, labels_ref, nll_ref, *, num_labels):
    nll, _ = _nll_and_logits(rep_ref[...], wt_ref[...],
                             b_ref[...].astype(jnp.float32),
                             labels_ref[...], num_labels)
    nll_ref[...] = nll


def _loss_logits_kernel(rep_ref, wt_ref, b_ref, labels_ref, nll_ref, logits_ref,
                        *, num_labels):
    nll, logits = _nll_and_logits(rep_ref[...], wt_ref[...],
                                  b_ref[...].astype(jnp.float32),
                                  labels_ref[...], num_labels)
    nll_ref[...] = nll
    logits_ref[...] = logits  # lane-dense (TB, Lp) store


def _choose_tile_b(batch, d, l_pad, itemsize, with_logits):
    # Conservative per-step double-buffered footprint budget: fits the v5e
    # 16 MiB scoped-VMEM default and leaves plenty of headroom on v7x (64 MiB).
    budget = 12 << 20
    tb = 512
    while tb > _SUBLANE:
        per_step = 2 * tb * d * itemsize + 2 * tb * 4 + 2 * tb * 4   # rep + labels + nll
        if with_logits:
            per_step += 2 * tb * l_pad * 4
        resident = 2 * (d * l_pad * itemsize + l_pad * 4)            # W^T + bias
        if per_step + resident <= budget:
            break
        tb //= 2
    return max(_SUBLANE, min(tb, _round_up(batch, _SUBLANE)))


def supervised_loss(rep, weight, bias, labels, *, return_logits=False,
                    ignore_index=_IGNORE_INDEX):
    """Fused classifier + cross-entropy (mean over non-ignored labels).

    rep:    [B, D] float (f32 or bf16) sentence embeddings.
    weight: [L, D] nn.Linear weight; bias: [L].
    labels: [B] int.
    Returns scalar loss (f32), plus logits[B, L] if return_logits=True.
    """
    B, D = rep.shape
    L = weight.shape[0]
    Lp = _round_up(L, _LANE)
    itemsize = jnp.dtype(rep.dtype).itemsize

    TB = _choose_tile_b(B, D, Lp, itemsize, return_logits)
    B_pad = _round_up(B, TB)

    wt = jnp.pad(weight.T.astype(rep.dtype), ((0, 0), (0, Lp - L)))          # (D, Lp)
    b2 = jnp.pad(bias.astype(jnp.float32), (0, Lp - L)).reshape(1, Lp)       # (1, Lp)
    lab = labels.astype(jnp.int32)
    rep_p, lab_p = rep, lab
    if B_pad != B:
        rep_p = jnp.pad(rep, ((0, B_pad - B), (0, 0)))
        lab_p = jnp.pad(lab, (0, B_pad - B), constant_values=ignore_index)
    lab2 = lab_p.reshape(B_pad, 1)

    grid = (B_pad // TB,)
    in_specs = [
        pl.BlockSpec((TB, D), lambda i: (i, 0)),   # rep tile (pipelined)
        pl.BlockSpec((D, Lp), lambda i: (0, 0)),   # W^T, resident across steps
        pl.BlockSpec((1, Lp), lambda i: (0, 0)),   # bias, resident
        pl.BlockSpec((TB, 1), lambda i: (i, 0)),   # labels tile
    ]
    out_shape = [jax.ShapeDtypeStruct((B_pad, 1), jnp.float32)]
    out_specs = [pl.BlockSpec((TB, 1), lambda i: (i, 0))]
    if return_logits:
        out_shape.append(jax.ShapeDtypeStruct((B_pad, Lp), jnp.float32))
        out_specs.append(pl.BlockSpec((TB, Lp), lambda i: (i, 0)))

    per_step = 2 * TB * D * itemsize + 4 * TB * 4
    if return_logits:
        per_step += 2 * TB * Lp * 4
    resident = 2 * (D * Lp * itemsize + Lp * 4)
    vmem_limit = int(min(64 << 20, max(16 << 20, 2 * (per_step + resident))))

    bytes_accessed = (B_pad * D * itemsize + D * Lp * itemsize + Lp * 4
                      + 2 * B_pad * 4
                      + (B_pad * Lp * 4 if return_logits else 0))
    cost = pl.CostEstimate(flops=2 * B_pad * D * Lp,
                           transcendentals=B_pad * Lp,
                           bytes_accessed=bytes_accessed)

    kernel = functools.partial(
        _loss_logits_kernel if return_logits else _loss_kernel, num_labels=L)

    outs = pl.pallas_call(
        kernel,
        out_shape=tuple(out_shape),
        grid=grid,
        in_specs=in_specs,
        out_specs=tuple(out_specs),
        compiler_params=pltpu.CompilerParams(
            dimension_semantics=("parallel",),      # batch tiles split across v7x cores
            vmem_limit_bytes=vmem_limit),
        cost_estimate=cost,
    )(rep_p, wt, b2, lab2)

    nll_pad = outs[0]                               # (B_pad, 1); padded/ignored rows are 0
    n_valid = jnp.sum(jnp.logical_and(lab >= 0, lab < L)).astype(jnp.float32)
    loss = jnp.sum(nll_pad) / n_valid               # mean over non-ignored targets

    if return_logits:
        return loss, outs[1][:B, :L]
    return loss


def supervised_forward(rep, weight, bias, labels=None):
    """Mirrors SupervisedLoss.forward given the backbone 'sentence_embedding' rep."""
    if labels is None:
        _, logits = supervised_loss(rep, weight, bias,
                                    jnp.zeros((rep.shape[0],), jnp.int32),
                                    return_logits=True)
        return rep, logits
    return supervised_loss(rep, weight, bias, labels)


def _reference(rep, weight, bias, labels):
    L = weight.shape[0]
    logits = rep @ weight.T + bias
    logz = jax.nn.logsumexp(logits, axis=-1)
    safe = jnp.clip(labels, 0, L - 1)
    lab_logit = jnp.take_along_axis(logits, safe[:, None], axis=-1)[:, 0]
    valid = jnp.logical_and(labels >= 0, labels < L)
    per = jnp.where(valid, logz - lab_logit, 0.0)
    return jnp.sum(per) / jnp.sum(valid), logits


if __name__ == "__main__":
    key = jax.random.PRNGKey(0)
    B, D, L = 8, 32, 4  # batch, sentence_embedding_dimension, num_labels

    k_rep, k_w, k_b, k_lab = jax.random.split(key, 4)
    rep = jax.random.normal(k_rep, (B, D), dtype=jnp.float32)

    # deterministic nn.Linear-style init: U(-1/sqrt(D), 1/sqrt(D))
    bound = 1.0 / (D ** 0.5)
    weight = jax.random.uniform(k_w, (L, D), minval=-bound, maxval=bound, dtype=jnp.float32)
    bias = jax.random.uniform(k_b, (L,), minval=-bound, maxval=bound, dtype=jnp.float32)
    labels = jax.random.randint(k_lab, (B,), 0, L, dtype=jnp.int32)

    # 1) training path: loss only (matches forward(labels=...) semantics)
    loss = supervised_loss(rep, weight, bias, labels)
    # 2) loss + lane-dense logits output
    loss2, logits = supervised_loss(rep, weight, bias, labels, return_logits=True)
    # 3) ignore_index=-100 handling (nn.CrossEntropyLoss default)
    labels_ig = labels.at[3].set(-100)
    loss_ig = supervised_loss(rep, weight, bias, labels_ig)
    # 4) inference path: labels=None -> (rep, logits)
    rep_out, logits_none = supervised_forward(rep, weight, bias, None)
    # 5) batch not a multiple of the tile / sublane width (exercises padding)
    B2 = 10
    rep2 = jax.random.normal(jax.random.PRNGKey(1), (B2, D), dtype=jnp.float32)
    labels2 = jax.random.randint(jax.random.PRNGKey(2), (B2,), 0, L, dtype=jnp.int32)
    loss_b2 = supervised_loss(rep2, weight, bias, labels2)

    jax.block_until_ready((loss, loss2, logits, loss_ig, logits_none, loss_b2))

    ref_loss, ref_logits = _reference(rep, weight, bias, labels)
    ref_loss_ig, _ = _reference(rep, weight, bias, labels_ig)
    ref_loss_b2, _ = _reference(rep2, weight, bias, labels2)

    assert jnp.allclose(loss, ref_loss, atol=1e-5, rtol=1e-5), (loss, ref_loss)
    assert jnp.allclose(loss2, ref_loss, atol=1e-5, rtol=1e-5), (loss2, ref_loss)
    assert jnp.allclose(logits, ref_logits, atol=1e-5, rtol=1e-5)
    assert jnp.allclose(logits_none, ref_logits, atol=1e-5, rtol=1e-5)
    assert jnp.allclose(loss_ig, ref_loss_ig, atol=1e-5, rtol=1e-5), (loss_ig, ref_loss_ig)
    assert jnp.allclose(loss_b2, ref_loss_b2, atol=1e-5, rtol=1e-5), (loss_b2, ref_loss_b2)

    print("KERNEL_OK")
</pallas_src>

<mosaic_0001>
module attributes {stable_mosaic.version = 11 : i64} {
  func.func @_loss_kernel(%arg0: i32, %arg1: memref<8x32xf32, #tpu.memory_space<vmem>>, %arg2: memref<32x128xf32, #tpu.memory_space<vmem>>, %arg3: memref<1x128xf32, #tpu.memory_space<vmem>>, %arg4: memref<8x1xi32, #tpu.memory_space<vmem>>, %arg5: memref<8x1xf32, #tpu.memory_space<vmem>>) attributes {dimension_semantics = [#tpu.dimension_semantics<parallel>], iteration_bounds = array<i64: 1>, scalar_prefetch = 0 : i64, scratch_operands = 0 : i64, tpu.core_type = #tpu.core_type<tc>, window_params = [{transform_indices = @transform_0, window_bounds = array<i64: 8, 32>}, {pipeline_mode = #tpu.pipeline_mode<synchronous>, transform_indices = @transform_1, window_bounds = array<i64: 32, 128>}, {pipeline_mode = #tpu.pipeline_mode<synchronous>, transform_indices = @transform_2, window_bounds = array<i64: 1, 128>}, {transform_indices = @transform_3, window_bounds = array<i64: 8, 1>}, {transform_indices = @transform_4, window_bounds = array<i64: 8, 1>}]} {
    %c0 = arith.constant 0 : index
    %c0_0 = arith.constant 0 : index
    %0 = vector.load %arg1[%c0, %c0_0] : memref<8x32xf32, #tpu.memory_space<vmem>>, vector<8x32xf32>
    %c0_1 = arith.constant 0 : index
    %c0_2 = arith.constant 0 : index
    %1 = vector.load %arg2[%c0_1, %c0_2] : memref<32x128xf32, #tpu.memory_space<vmem>>, vector<32x128xf32>
    %c0_3 = arith.constant 0 : index
    %c0_4 = arith.constant 0 : index
    %2 = vector.load %arg3[%c0_3, %c0_4] : memref<1x128xf32, #tpu.memory_space<vmem>>, vector<1x128xf32>
    %c0_5 = arith.constant 0 : index
    %c0_6 = arith.constant 0 : index
    %3 = vector.load %arg4[%c0_5, %c0_6] : memref<8x1xi32, #tpu.memory_space<vmem>>, vector<8x1xi32>
    %cst = arith.constant dense<0.000000e+00> : vector<8x128xf32>
    %4 = tpu.matmul %0, %1, %cst {dimension_numbers = #tpu.dot_dimension_numbers<[1], [0], [0], [1], [0, 0, 1, 1], [], []>} : vector<8x32xf32>, vector<32x128xf32>, vector<8x128xf32> -> vector<8x128xf32>
    %5 = vector.broadcast %2 : vector<1x128xf32> to vector<8x128xf32>
    %6 = arith.addf %4, %5 : vector<8x128xf32>
    %7 = tpu.iota {dimensions = array<i32: 1>} : vector<8x128xi32>
    %c4_i32 = arith.constant 4 : i32
    %8 = vector.broadcast %c4_i32 : i32 to vector<8x128xi32>
    %9 = arith.cmpi slt, %7, %8 : vector<8x128xi32>
    %cst_7 = arith.constant 0xFF800000 : f32
    %10 = vector.broadcast %cst_7 : f32 to vector<8x128xf32>
    %11 = arith.select %9, %6, %10 : vector<8x128xi1>, vector<8x128xf32>
    %cst_8 = arith.constant dense<0xFF800000> : vector<8xf32>
    %12 = vector.multi_reduction <maximumf>, %11, %cst_8 [1] : vector<8x128xf32> to vector<8xf32>
    %13 = vector.shape_cast %12 : vector<8xf32> to vector<8x1xf32>
    %14 = vector.broadcast %13 : vector<8x1xf32> to vector<8x128xf32>
    %15 = arith.subf %11, %14 : vector<8x128xf32>
    %16 = math.exp %15 : vector<8x128xf32>
    %cst_9 = arith.constant dense<0.000000e+00> : vector<8xf32>
    %17 = vector.multi_reduction <add>, %16, %cst_9 [1] : vector<8x128xf32> to vector<8xf32>
    %18 = vector.shape_cast %17 : vector<8xf32> to vector<8x1xf32>
    %19 = math.log %18 : vector<8x1xf32>
    %20 = arith.addf %13, %19 : vector<8x1xf32>
    %21 = vector.broadcast %3 : vector<8x1xi32> to vector<8x128xi32>
    %22 = arith.cmpi eq, %7, %21 : vector<8x128xi32>
    %23 = arith.extui %22 : vector<8x128xi1> to vector<8x128xi32>
    %24 = arith.sitofp %23 : vector<8x128xi32> to vector<8x128xf32>
    %25 = arith.mulf %6, %24 : vector<8x128xf32>
    %cst_10 = arith.constant dense<0.000000e+00> : vector<8xf32>
    %26 = vector.multi_reduction <add>, %25, %cst_10 [1] : vector<8x128xf32> to vector<8xf32>
    %27 = vector.shape_cast %26 : vector<8xf32> to vector<8x1xf32>
    %c0_i32 = arith.constant 0 : i32
    %28 = vector.broadcast %c0_i32 : i32 to vector<8x1xi32>
    %29 = arith.cmpi sge, %3, %28 : vector<8x1xi32>
    %c4_i32_11 = arith.constant 4 : i32
    %30 = vector.broadcast %c4_i32_11 : i32 to vector<8x1xi32>
    %31 = arith.cmpi slt, %3, %30 : vector<8x1xi32>
    %32 = arith.andi %29, %31 : vector<8x1xi1>
    %33 = arith.subf %20, %27 : vector<8x1xf32>
    %cst_12 = arith.constant 0.000000e+00 : f32
    %34 = vector.broadcast %cst_12 : f32 to vector<8x1xf32>
    %35 = arith.select %32, %33, %34 : vector<8x1xi1>, vector<8x1xf32>
    %c0_13 = arith.constant 0 : index
    %c0_14 = arith.constant 0 : index
    %36 = vector.load %arg5[%c0_13, %c0_14] : memref<8x1xf32, #tpu.memory_space<vmem>>, vector<8x1xf32>
    tpu.vector_store %arg5[%c0_13, %c0_14], %35 {strides = array<i32>} : memref<8x1xf32, #tpu.memory_space<vmem>>, vector<8x1xf32>,
    return
  }
  func.func @transform_0(%arg0: i32) -> (i32, i32) {
    %c0_i32 = arith.constant 0 : i32
    %c0_i32_0 = arith.constant 0 : i32
    return %arg0, %c0_i32 : i32, i32
  }
  func.func @transform_1(%arg0: i32) -> (i32, i32) {
    %c0_i32 = arith.constant 0 : i32
    %c0_i32_0 = arith.constant 0 : i32
    %c0_i32_1 = arith.constant 0 : i32
    return %c0_i32, %c0_i32_0 : i32, i32
  }
  func.func @transform_2(%arg0: i32) -> (i32, i32) {
    %c0_i32 = arith.constant 0 : i32
    %c0_i32_0 = arith.constant 0 : i32
    %c0_i32_1 = arith.constant 0 : i32
    return %c0_i32, %c0_i32_0 : i32, i32
  }
  func.func @transform_3(%arg0: i32) -> (i32, i32) {
    %c0_i32 = arith.constant 0 : i32
    %c0_i32_0 = arith.constant 0 : i32
    return %arg0, %c0_i32 : i32, i32
  }
  func.func @transform_4(%arg0: i32) -> (i32, i32) {
    %c0_i32 = arith.constant 0 : i32
    %c0_i32_0 = arith.constant 0 : i32
    return %arg0, %c0_i32 : i32, i32
  }
}

</mosaic_0001>

<llo_original>
// kernel: tpu_custom_call.1
$region0: #{tpu_custom_call.1}
  #allocation0 [shape = 'u32[]', space=smem, size = 0x4, offset = 0x4, fixed_abs, tag = 'smem constant byte address 0x4 - core index']
  #allocation1 [shape = 'u32[144,128]{1,0:T(1,128)}', space=vmem, size = 0x12000, scoped, tag = 'internal scratch']
  %s0 = inlined_call_operand.vmem [shape: f32[8,32], index: 0, kind: input, shape index: {}]
  %s1 = inlined_call_operand.hbm [shape: f32[32,128], index: 1, kind: input, shape index: {}]
  %s2 = inlined_call_operand.vmem [shape: f32[1,128], index: 2, kind: input, shape index: {}]
  %s3 = inlined_call_operand.vmem [shape: s32[8,1], index: 3, kind: input, shape index: {}]
  %s4 = inlined_call_operand.vmem [shape: f32[8,1], index: 4, kind: output, shape index: {}]
  %s5 = sld [smem:[#allocation0]]
  $region30: #{tpu_custom_call.1} parent=0
    _
  %s7 = ssub.s32 1, %s5
  %s8 = scalar_select 0, %s7, %s5
  $region1: #{tpu_custom_call.1} parent=0
    #allocation2 [shape = 'u8[16384]{0}', space=vmem, size = 0x4000, scoped, tag = 'input window, operand 1, single buffered']
    #allocation3 [shape = 's32[1]{0}', space=sflag, size = 0x4, scoped, tag = 'scoped memory for tpu_custom_call.1']
    %9 = vsyncpa [#allocation3], 0
    // Predicated region
    $region2: #{tpu_custom_call.1} parent=1 // pred_check
      _
    $region3: #{tpu_custom_call.1} parent=1 // pred_check_branch
      %11 = sbr.rel (0) target = $region5
    $region4: #{tpu_custom_call.1} parent=1 // pred_region
      _
    $region5: #{tpu_custom_call.1} parent=1 // pred_fallthru
      _
    // Predicated region
    $region6: #{tpu_custom_call.1} parent=1 // pred_check
      _
    $region7: #{tpu_custom_call.1} parent=1 // pred_check_branch
      %13 = sbr.rel (0) target = $region9
    $region8: #{tpu_custom_call.1} parent=1 // pred_region
      %s15 = ssub.s32 512, 512
      %16 = vsyncadd [#allocation3], %s15
      %s17 = sshll.u32 [#allocation2], 4
      %s18 = int_to_ptr.vmem [resolvable:$true] %s17
      %23 = dma.hbm_to_vmem [thread:$0]  %s1, 512, %s18, [#allocation3], 128, 128, 8
    $region9: #{tpu_custom_call.1} parent=1 // pred_fallthru
      _
    // Predicated region
    $region10: #{tpu_custom_call.1} parent=1 // pred_check
      _
    $region11: #{tpu_custom_call.1} parent=1 // pred_check_branch
      %25 = sbr.rel (0) target = $region13
    $region12: #{tpu_custom_call.1} parent=1 // pred_region
      _
    $region13: #{tpu_custom_call.1} parent=1 // pred_fallthru
      _
    // Predicated region
    $region14: #{tpu_custom_call.1} parent=1 // pred_check
      _
    $region15: #{tpu_custom_call.1} parent=1 // pred_check_branch
      %27 = sbr.rel (0) target = $region17
    $region16: #{tpu_custom_call.1} parent=1 // pred_region
      _
    $region17: #{tpu_custom_call.1} parent=1 // pred_fallthru
      _
    // Predicated region
    $region18: #{tpu_custom_call.1} parent=1 // pred_check
      _
    $region19: #{tpu_custom_call.1} parent=1 // pred_check_branch
      %29 = sbr.rel (0) target = $region21
    $region20: #{tpu_custom_call.1} parent=1 // pred_region
      %30 = dma.done [#allocation3], 512
    $region21: #{tpu_custom_call.1} parent=1 // pred_fallthru
      _
    %v31 = vld [vmem:[%s0] sm:$0xff]
    %v32 = vld [vmem:[#allocation2] sm:$0xff]
    %v33 = vld [vmem:[#allocation2 + $0x8] sm:$0xff]
    %v34 = vld [vmem:[#allocation2 + $0x10] sm:$0xff]
    %v35 = vld [vmem:[#allocation2 + $0x18] sm:$0xff]
    %v36 = vld [vmem:[%s2] sm:$0x1]
    %v37 = vld [vmem:[%s3] sm:$0xff]
    %v39 = vlaneseq
    %v40 = vshrl.u32 %v39, 7
    %v41 = vsub.s32 0, %v40
    %v42 = vrot.slane %v36, %v41
    %vm44 = vcmask 261120
    %v46 = vsel %vm44, %v31, 0
    %48 = vmatprep.subr.mxu0 0.0
    %49 = vmatpush1.msra.mxu0 %v32
    %50 = vmatprep.subr.mxu0 0.0
    %51 = vmatpush1.msra.mxu0 %v33
    %52 = vmatprep.subr.mxu0 0.0
    %53 = vmatpush1.msra.mxu0 %v34
    %54 = vmatprep.subr.mxu0 0.0
    %55 = vmatpush1.msra.mxu0 %v35
    %56 = vmatprep.subr.mxu0 0.0
    %57 = vmatpush1.msra.mxu0 0.0
    %58 = vmatprep.subr.mxu0 0.0
    %59 = vmatpush1.msra.mxu0 0.0
    %60 = vmatprep.subr.mxu0 0.0
    %61 = vmatpush1.msra.mxu0 0.0
    %62 = vmatprep.subr.mxu0 0.0
    %63 = vmatpush1.msra.mxu0 0.0
    %64 = vmatprep.subr.mxu0 0.0
    %65 = vmatpush1.msra.mxu0 0.0
    %66 = vmatprep.subr.mxu0 0.0
    %67 = vmatpush1.msra.mxu0 0.0
    %68 = vmatprep.subr.mxu0 0.0
    %69 = vmatpush1.msra.mxu0 0.0
    %70 = vmatprep.subr.mxu0 0.0
    %71 = vmatpush1.msra.mxu0 0.0
    %72 = vmatprep.subr.mxu0 0.0
    %73 = vmatpush1.msra.mxu0 0.0
    %74 = vmatprep.subr.mxu0 0.0
    %75 = vmatpush1.msra.mxu0 0.0
    %76 = vmatprep.subr.mxu0 0.0
    %77 = vmatpush1.msra.mxu0 0.0
    %78 = vmatprep.subr.mxu0 0.0
    %79 = vmatpush1.msra.mxu0 0.0
    %80 = vmatprep.subr.mxu0 0.0
    %81 = vmatpush1.msra.mxu0 0.0
    %82 = vmatprep.subr.mxu0 0.0
    %83 = vmatpush1.msra.mxu0 0.0
    %84 = vmatprep.subr.mxu0 0.0
    %85 = vmatpush1.msra.mxu0 0.0
    %86 = vmatprep.subr.mxu0 0.0
    %87 = vmatpush1.msra.mxu0 0.0
    %88 = vmatprep.subr.mxu0 0.0
    %89 = vmatpush1.msra.mxu0 0.0
    %90 = vmatprep.subr.mxu0 0.0
    %91 = vmatpush1.msra.mxu0 0.0
    %92 = vmatprep.subr.mxu0 0.0
    %93 = vmatpush1.msra.mxu0 0.0
    %94 = vmatprep.subr.mxu0 0.0
    %95 = vmatpush1.msra.mxu0 0.0
    %96 = vmatprep.subr.mxu0 0.0
    %97 = vmatpush1.msra.mxu0 0.0
    %98 = vmatprep.subr.mxu0 0.0
    %99 = vmatpush1.msra.mxu0 0.0
    %100 = vmatprep.subr.mxu0 0.0
    %101 = vmatpush1.msra.mxu0 0.0
    %102 = vmatprep.subr.mxu0 0.0
    %103 = vmatpush1.msra.mxu0 0.0
    %104 = vmatprep.subr.mxu0 0.0
    %105 = vmatpush1.msra.mxu0 0.0
    %106 = vmatprep.subr.mxu0 0.0
    %107 = vmatpush1.msra.mxu0 0.0
    %108 = vmatprep.subr.mxu0 0.0
    %109 = vmatpush1.msra.mxu0 0.0
    %110 = vmatprep.subr.mxu0 0.0
    %111 = vmatpush1.msra.mxu0 0.0
    %112 = vmatprep.mubr.f32.mxu0 0.0
    %113 = vmatmul.mubr.f32.gmra.mrb[0].mxu0 %v46
    %v114 = vpop.f32.mrb[0].mxu0
    %v115 = vadd.f32 %v42, %v114
    %v116 = vpop.f32.mrb[0].mxu0
    %117 = vdwg.mxu0
    %v118 = vlaneseq
    %v119 = vand.u32 %v118, 127
    %vm120 = vcmp.lt.s32.totalorder %v119, 4
    %v121 = vsel %vm120, %v115, -inf
    %122 = vmax.xlane.f32.xlu0 %v121
    %v123 = vpop.xlane.xlu0 %122
    %v124 = vsub.f32 %v121, %v123
    %v125 = vmul.f32 %v124, 1.442695
    %v126 = vpow.pop %v125
    %127 = vadd.xlane.f32.xlu0 %v126
    %v128 = vpop.xlane.xlu0 %127
    %v129 = vlog2.pop %v128
    %v130 = vmul.f32 %v129, 0.6931472
    %v131 = vadd.f32 %v123, %v130
    %132 = vset.pattern.permute.xlu0 0
    %133 = vperm.xlu0 %132, %v37
    %v134 = vpop.permute.xlu0 %133
    %vm135 = vcmp.eq.s32.totalorder %v119, %v134
    %v136 = vsel %vm135, 1, 0
    %v137 = vcvt.s32.f32 %v136
    %v138 = vmul.f32 %v115, %v137
    %139 = vadd.xlane.f32.xlu0 %v138
    %v140 = vpop.xlane.xlu0 %139
    %vm141 = vcmp.ge.s32.totalorder %v37, 0
    %vm142 = vcmp.lt.s32.totalorder %v37, 4
    %vm143 = vmand %vm141, %vm142
    %v144 = vsub.f32 %v131, %v140
    %v145 = vsel %vm143, %v144, 0.0
    %vm146 = vcmask 7168
    %147 = vst.msk [vmem:[%s4] sm:$0xff] %vm146, %v145
    // Predicated region
    $region22: #{tpu_custom_call.1} parent=1 // pred_check
      _
    $region23: #{tpu_custom_call.1} parent=1 // pred_check_branch
      %149 = sbr.rel (0) target = $region25
    $region24: #{tpu_custom_call.1} parent=1 // pred_region
      _
    $region25: #{tpu_custom_call.1} parent=1 // pred_fallthru
      _
    // Predicated region
    $region26: #{tpu_custom_call.1} parent=1 // pred_check
      _
    $region27: #{tpu_custom_call.1} parent=1 // pred_check_branch
      %151 = sbr.rel (0) target = $region29
    $region28: #{tpu_custom_call.1} parent=1 // pred_region
      _
    $region29: #{tpu_custom_call.1} parent=1 // pred_fallthru
      _
    %152 = vsyncpa [#allocation3], 1

</llo_original>
